<compile_context>
chip_gen: v7x
topology: tpu7x:2x2x1
jax: 0.10.0
libtpu: 0.0.40
codegen_flags: <defaults>
</compile_context>

<pallas_src>
import functools

import jax
import jax.numpy as jnp
from jax.experimental import pallas as pl
from jax.experimental.pallas import tpu as pltpu


def _cnnet_kernel(x_ref, a_ref, bp1_ref, bp2_ref, v1_ref, v2_ref, bl_ref,
                  o_ref, *, o_pad, l1, l2, lp1, lp2, k1, k2, stride, slope):
    x = x_ref[...]                                                  # (CE, TB) bf16
    # Fused conv1+conv2 as ONE native-rate bf16 MXU matmul, f32 accumulate.
    z = jnp.dot(a_ref[...], x, preferred_element_type=jnp.float32)  # (R, TB) f32

    def maxpool(zb, l_conv, l_pool, ksz):
        # zb: (l_conv*o_pad, TB), row index = l*o_pad + o.  o_pad is a multiple
        # of 8, so every slice below is 8-sublane aligned (no sublane rolls).
        tb = zb.shape[-1]
        if stride == 1:
            m = zb[0:l_pool * o_pad, :]
            for k in range(1, ksz):
                m = jnp.maximum(m, zb[k * o_pad:(k + l_pool) * o_pad, :])
            return m
        # General-stride fallback (not exercised by the default config).
        # TODO(synk): restructure via A row ordering if stride != 1 becomes hot.
        zr = zb.reshape(l_conv, o_pad, tb)
        stop = (l_pool - 1) * stride + 1
        m = zr[0:stop:stride]
        for k in range(1, ksz):
            m = jnp.maximum(m, zr[k:k + stop:stride])
        return m.reshape(l_pool * o_pad, tb)

    # Pool FIRST: the per-row conv bias and the monotone LeakyReLU commute with
    # max, so bias + activation run on the smaller pooled blocks.
    p1 = maxpool(z[:l1 * o_pad, :], l1, lp1, k1)                    # (lp1*O8, TB)
    p2 = maxpool(z[l1 * o_pad:, :], l2, lp2, k2)                    # (lp2*O8, TB)
    p1 = p1 + bp1_ref[...]
    p2 = p2 + bp2_ref[...]
    p1 = jnp.maximum(p1, slope * p1)                                # LeakyReLU
    p2 = jnp.maximum(p2, slope * p2)

    # Final Linear as two tiny bf16 MXU matmuls (MXU has slack) -> lane-dense
    # (1, TB) output store.
    s = (jnp.dot(v1_ref[...], p1.astype(jnp.bfloat16),
                 preferred_element_type=jnp.float32)
         + jnp.dot(v2_ref[...], p2.astype(jnp.bfloat16),
                   preferred_element_type=jnp.float32)
         + bl_ref[...])                                             # (1, TB)
    o_ref[...] = s


def _conv_as_matrix(w, ksz, l_conv, stride, dilation, padding, c_in, e_in,
                    o_pad):
    """A[l*o_pad+o, c*E+e] = w[o,c,k] with e = l*stride + k*dilation - padding.

    Built over the UNPADDED embedding axis: taps that land in the zero-pad
    region contribute 0 and are simply dropped.  Rows with o >= out_ch are 0.
    """
    out_ch = w.shape[0]
    wf = w.astype(jnp.float32)
    a = jnp.zeros((l_conv, o_pad, c_in, e_in), jnp.float32)
    for l in range(l_conv):
        for k in range(ksz):
            e = l * stride + k * dilation - padding
            if 0 <= e < e_in:
                a = a.at[l, :out_ch, :, e].set(wf[:, :, k])
    return a.reshape(l_conv * o_pad, c_in * e_in)


def cnnet_forward(x, params, *, kernel_1, kernel_2, stride, padding, dilation,
                  batch_tile=2048):
    """x: (B, seq_len, embedding_size) float32 (PyTorch NCL conv layout)."""
    w1, b1, w2, b2, wl, bl = params
    B, C, E = x.shape
    O = w1.shape[0]
    O8 = ((O + 7) // 8) * 8        # pad out_ch to 8 sublanes -> aligned pooling

    def conv_out(k):
        return (E + 2 * padding - dilation * (k - 1) - 1) // stride + 1

    def pool_out(lc, k):           # MaxPool1d(k, stride): padding=0, dilation=1
        return (lc - k) // stride + 1

    l1, l2 = conv_out(kernel_1), conv_out(kernel_2)
    lp1, lp2 = pool_out(l1, kernel_1), pool_out(l2, kernel_2)
    CE = C * E
    R = (l1 + l2) * O8

    # Lane-dense batch tile: multiple of 128, large to amortize per-step
    # overhead, capped near B for small inputs.  No batch padding: the last
    # grid tile is ragged (junk lanes never mix across samples; sliced off).
    tb_req = max(128, (batch_tile // 128) * 128)
    TB = min(tb_req, pl.cdiv(B, 128) * 128)
    n_tiles = pl.cdiv(B, TB)

    # ---- glue (trace-time re-layout only) ------------------------------------
    # Single fused XLA pass: (B,C,E) f32 -> (C*E, B) bf16 slab, batch on lanes.
    # TODO(synk): if an upstream op can emit x directly in (C*E, B) bf16 layout,
    # this pass disappears entirely.
    xT = jnp.transpose(x, (1, 2, 0)).reshape(CE, B).astype(jnp.bfloat16)

    a1 = _conv_as_matrix(w1, kernel_1, l1, stride, dilation, padding, C, E, O8)
    a2 = _conv_as_matrix(w2, kernel_2, l2, stride, dilation, padding, C, E, O8)
    a = jnp.concatenate([a1, a2], axis=0).astype(jnp.bfloat16)      # (R, CE)

    # Conv biases in POOLED row layout (bias commutes with maxpool/LeakyReLU).
    bp1 = jnp.zeros((lp1, O8), jnp.float32).at[:, :O].set(
        jnp.broadcast_to(b1.astype(jnp.float32), (lp1, O))).reshape(lp1 * O8, 1)
    bp2 = jnp.zeros((lp2, O8), jnp.float32).at[:, :O].set(
        jnp.broadcast_to(b2.astype(jnp.float32), (lp2, O))).reshape(lp2 * O8, 1)

    # Linear weights, matching torch's cat((x1,x2),2).reshape(B,-1) flatten
    # order (flat index = o*(lp1+lp2) + pos), re-laid-out to the pooled rows.
    wl2d = wl.reshape(O, lp1 + lp2).astype(jnp.float32)
    v1 = jnp.zeros((lp1, O8), jnp.float32).at[:, :O].set(
        wl2d[:, :lp1].T).reshape(1, lp1 * O8).astype(jnp.bfloat16)
    v2 = jnp.zeros((lp2, O8), jnp.float32).at[:, :O].set(
        wl2d[:, lp1:].T).reshape(1, lp2 * O8).astype(jnp.bfloat16)
    bl2d = bl.reshape(1, 1).astype(jnp.float32)

    kernel = functools.partial(
        _cnnet_kernel, o_pad=O8, l1=l1, l2=l2, lp1=lp1, lp2=lp2,
        k1=kernel_1, k2=kernel_2, stride=stride, slope=0.01)

    flops = 2 * R * CE * n_tiles * TB + 2 * (lp1 + lp2) * O8 * n_tiles * TB
    bytes_accessed = (CE * B * 2 + R * CE * 2
                      + (lp1 + lp2) * O8 * (2 + 4) + n_tiles * TB * 4)

    out = pl.pallas_call(
        kernel,
        out_shape=jax.ShapeDtypeStruct((1, n_tiles * TB), jnp.float32),
        grid_spec=pltpu.PrefetchScalarGridSpec(
            num_scalar_prefetch=0,
            grid=(n_tiles,),
            in_specs=[
                pl.BlockSpec((CE, TB), lambda i: (0, i)),        # x (batch on lanes)
                pl.BlockSpec((R, CE), lambda i: (0, 0)),         # fused conv matrix
                pl.BlockSpec((lp1 * O8, 1), lambda i: (0, 0)),   # conv1 bias (pooled)
                pl.BlockSpec((lp2 * O8, 1), lambda i: (0, 0)),   # conv2 bias (pooled)
                pl.BlockSpec((1, lp1 * O8), lambda i: (0, 0)),   # linear W, branch 1
                pl.BlockSpec((1, lp2 * O8), lambda i: (0, 0)),   # linear W, branch 2
                pl.BlockSpec((1, 1), lambda i: (0, 0)),          # linear bias
            ],
            out_specs=pl.BlockSpec((1, TB), lambda i: (0, i)),   # lane-dense output
        ),
        compiler_params=pltpu.CompilerParams(
            dimension_semantics=("parallel",)),                  # v7x 2-TC batch split
        cost_estimate=pl.CostEstimate(
            flops=flops, transcendentals=0, bytes_accessed=bytes_accessed),
    )(xT, a, bp1, bp2, v1, v2, bl2d)
    return out[0, :B].reshape(B, 1)


def reference_forward(x, params, *, kernel_1, kernel_2, stride, padding, dilation):
    """Pure-JAX f32 reference replicating the PyTorch forward exactly."""
    w1, b1, w2, b2, wl, bl = params

    def conv1d(x, w, b):
        y = jax.lax.conv_general_dilated(
            x, w, window_strides=(stride,), padding=[(padding, padding)],
            rhs_dilation=(dilation,), dimension_numbers=("NCH", "OIH", "NCH"))
        return y + b[None, :, None]

    def leaky(a):
        return jnp.where(a > 0, a, 0.01 * a)

    def maxpool(z, k):
        lc = z.shape[-1]
        lp = (lc - k) // stride + 1
        cands = [z[:, :, i:i + (lp - 1) * stride + 1:stride] for i in range(k)]
        return functools.reduce(jnp.maximum, cands)

    x1 = maxpool(leaky(conv1d(x, w1, b1)), kernel_1)
    x2 = maxpool(leaky(conv1d(x, w2, b2)), kernel_2)
    union = jnp.concatenate([x1, x2], axis=2)
    flat = union.reshape(union.shape[0], -1)
    return flat @ wl.T + bl[None, :]


if __name__ == "__main__":
    # Module hyperparameters (small, consistent with CNNet.__init__).
    embedding_size, seq_len, out_size = 16, 8, 4
    kernel_1, kernel_2 = 3, 5
    stride, padding, dilation, p = 1, 0, 1, 0.25
    B = 2

    # in_feature() computation (matches the actual layers for padding=0, dilation=1).
    l1 = (embedding_size + 2 * padding - dilation * (kernel_1 - 1) - 1) // stride + 1
    l2 = (embedding_size + 2 * padding - dilation * (kernel_2 - 1) - 1) // stride + 1
    lp1 = (l1 + 2 * padding - dilation * (kernel_1 - 1) - 1) // stride + 1
    lp2 = (l2 + 2 * padding - dilation * (kernel_2 - 1) - 1) // stride + 1
    in_feat = (lp1 + lp2) * out_size

    key = jax.random.PRNGKey(0)
    ks = jax.random.split(key, 7)

    def uni(k, shape, fan_in):
        bound = 1.0 / (fan_in ** 0.5)
        return jax.random.uniform(k, shape, jnp.float32, -bound, bound)

    # Deterministic synthetic parameters (PyTorch layer shapes).
    w1 = uni(ks[0], (out_size, seq_len, kernel_1), seq_len * kernel_1)
    b1 = uni(ks[1], (out_size,), seq_len * kernel_1)
    w2 = uni(ks[2], (out_size, seq_len, kernel_2), seq_len * kernel_2)
    b2 = uni(ks[3], (out_size,), seq_len * kernel_2)
    wl = uni(ks[4], (1, in_feat), in_feat)
    bl = uni(ks[5], (1,), in_feat)
    x = jax.random.normal(ks[6], (B, seq_len, embedding_size), jnp.float32)

    params = (w1, b1, w2, b2, wl, bl)

    out = cnnet_forward(x, params, kernel_1=kernel_1, kernel_2=kernel_2,
                        stride=stride, padding=padding, dilation=dilation)
    out = jax.block_until_ready(out)

    ref = reference_forward(x, params, kernel_1=kernel_1, kernel_2=kernel_2,
                            stride=stride, padding=padding, dilation=dilation)

    assert out.shape == (B, 1), out.shape
    # bf16 MXU matmuls (f32 accumulate) -> relaxed tolerance vs the f32 reference.
    assert jnp.allclose(out, ref, atol=2e-2, rtol=2e-2), (out, ref)
    print("KERNEL_OK")
</pallas_src>

<mosaic_0001>
module attributes {stable_mosaic.version = 11 : i64} {
  func.func @_cnnet_kernel(%arg0: i32, %arg1: memref<128x128xbf16, #tpu.memory_space<vmem>>, %arg2: memref<208x128xbf16, #tpu.memory_space<vmem>>, %arg3: memref<96x1xf32, #tpu.memory_space<vmem>>, %arg4: memref<64x1xf32, #tpu.memory_space<vmem>>, %arg5: memref<1x96xbf16, #tpu.memory_space<vmem>>, %arg6: memref<1x64xbf16, #tpu.memory_space<vmem>>, %arg7: memref<1x1xf32, #tpu.memory_space<vmem>>, %arg8: memref<1x128xf32, #tpu.memory_space<vmem>>) attributes {dimension_semantics = [#tpu.dimension_semantics<parallel>], iteration_bounds = array<i64: 1>, scalar_prefetch = 0 : i64, scratch_operands = 0 : i64, tpu.core_type = #tpu.core_type<tc>, window_params = [{transform_indices = @transform_0, window_bounds = array<i64: 128, 128>}, {pipeline_mode = #tpu.pipeline_mode<synchronous>, transform_indices = @transform_1, window_bounds = array<i64: 208, 128>}, {pipeline_mode = #tpu.pipeline_mode<synchronous>, transform_indices = @transform_2, window_bounds = array<i64: 96, 1>}, {pipeline_mode = #tpu.pipeline_mode<synchronous>, transform_indices = @transform_3, window_bounds = array<i64: 64, 1>}, {pipeline_mode = #tpu.pipeline_mode<synchronous>, transform_indices = @transform_4, window_bounds = array<i64: 1, 96>}, {pipeline_mode = #tpu.pipeline_mode<synchronous>, transform_indices = @transform_5, window_bounds = array<i64: 1, 64>}, {pipeline_mode = #tpu.pipeline_mode<synchronous>, transform_indices = @transform_6, window_bounds = array<i64: 1, 1>}, {transform_indices = @transform_7, window_bounds = array<i64: 1, 128>}]} {
    %c0 = arith.constant 0 : index
    %c0_0 = arith.constant 0 : index
    %0 = vector.load %arg1[%c0, %c0_0] : memref<128x128xbf16, #tpu.memory_space<vmem>>, vector<128x128xbf16>
    %c0_1 = arith.constant 0 : index
    %c0_2 = arith.constant 0 : index
    %1 = vector.load %arg2[%c0_1, %c0_2] : memref<208x128xbf16, #tpu.memory_space<vmem>>, vector<208x128xbf16>
    %cst = arith.constant dense<0.000000e+00> : vector<208x128xf32>
    %2 = tpu.matmul %1, %0, %cst {dimension_numbers = #tpu.dot_dimension_numbers<[1], [0], [0], [1], [0, 0, 1, 1], [], []>} : vector<208x128xbf16>, vector<128x128xbf16>, vector<208x128xf32> -> vector<208x128xf32>
    %3 = vector.extract_strided_slice %2 {offsets = [0, 0], sizes = [112, 128], strides = [1, 1]} : vector<208x128xf32> to vector<112x128xf32>
    %4 = vector.extract_strided_slice %3 {offsets = [0, 0], sizes = [96, 128], strides = [1, 1]} : vector<112x128xf32> to vector<96x128xf32>
    %5 = vector.extract_strided_slice %3 {offsets = [8, 0], sizes = [96, 128], strides = [1, 1]} : vector<112x128xf32> to vector<96x128xf32>
    %6 = arith.maximumf %4, %5 : vector<96x128xf32>
    %7 = vector.extract_strided_slice %3 {offsets = [16, 0], sizes = [96, 128], strides = [1, 1]} : vector<112x128xf32> to vector<96x128xf32>
    %8 = arith.maximumf %6, %7 : vector<96x128xf32>
    %9 = vector.extract_strided_slice %2 {offsets = [112, 0], sizes = [96, 128], strides = [1, 1]} : vector<208x128xf32> to vector<96x128xf32>
    %10 = vector.extract_strided_slice %9 {offsets = [0, 0], sizes = [64, 128], strides = [1, 1]} : vector<96x128xf32> to vector<64x128xf32>
    %11 = vector.extract_strided_slice %9 {offsets = [8, 0], sizes = [64, 128], strides = [1, 1]} : vector<96x128xf32> to vector<64x128xf32>
    %12 = arith.maximumf %10, %11 : vector<64x128xf32>
    %13 = vector.extract_strided_slice %9 {offsets = [16, 0], sizes = [64, 128], strides = [1, 1]} : vector<96x128xf32> to vector<64x128xf32>
    %14 = arith.maximumf %12, %13 : vector<64x128xf32>
    %15 = vector.extract_strided_slice %9 {offsets = [24, 0], sizes = [64, 128], strides = [1, 1]} : vector<96x128xf32> to vector<64x128xf32>
    %16 = arith.maximumf %14, %15 : vector<64x128xf32>
    %17 = vector.extract_strided_slice %9 {offsets = [32, 0], sizes = [64, 128], strides = [1, 1]} : vector<96x128xf32> to vector<64x128xf32>
    %18 = arith.maximumf %16, %17 : vector<64x128xf32>
    %c0_3 = arith.constant 0 : index
    %c0_4 = arith.constant 0 : index
    %19 = vector.load %arg3[%c0_3, %c0_4] : memref<96x1xf32, #tpu.memory_space<vmem>>, vector<96x1xf32>
    %20 = vector.broadcast %19 : vector<96x1xf32> to vector<96x128xf32>
    %21 = arith.addf %8, %20 : vector<96x128xf32>
    %c0_5 = arith.constant 0 : index
    %c0_6 = arith.constant 0 : index
    %22 = vector.load %arg4[%c0_5, %c0_6] : memref<64x1xf32, #tpu.memory_space<vmem>>, vector<64x1xf32>
    %23 = vector.broadcast %22 : vector<64x1xf32> to vector<64x128xf32>
    %24 = arith.addf %18, %23 : vector<64x128xf32>
    %cst_7 = arith.constant 0.00999999977 : f32
    %25 = vector.broadcast %cst_7 : f32 to vector<96x128xf32>
    %26 = arith.mulf %25, %21 : vector<96x128xf32>
    %27 = arith.maximumf %21, %26 : vector<96x128xf32>
    %cst_8 = arith.constant 0.00999999977 : f32
    %28 = vector.broadcast %cst_8 : f32 to vector<64x128xf32>
    %29 = arith.mulf %28, %24 : vector<64x128xf32>
    %30 = arith.maximumf %24, %29 : vector<64x128xf32>
    %c0_9 = arith.constant 0 : index
    %c0_10 = arith.constant 0 : index
    %31 = vector.load %arg5[%c0_9, %c0_10] : memref<1x96xbf16, #tpu.memory_space<vmem>>, vector<1x96xbf16>
    %32 = arith.truncf %27 : vector<96x128xf32> to vector<96x128xbf16>
    %cst_11 = arith.constant dense<0.000000e+00> : vector<1x128xf32>
    %33 = tpu.matmul %31, %32, %cst_11 {dimension_numbers = #tpu.dot_dimension_numbers<[1], [0], [0], [1], [0, 0, 1, 1], [], []>} : vector<1x96xbf16>, vector<96x128xbf16>, vector<1x128xf32> -> vector<1x128xf32>
    %c0_12 = arith.constant 0 : index
    %c0_13 = arith.constant 0 : index
    %34 = vector.load %arg6[%c0_12, %c0_13] : memref<1x64xbf16, #tpu.memory_space<vmem>>, vector<1x64xbf16>
    %35 = arith.truncf %30 : vector<64x128xf32> to vector<64x128xbf16>
    %cst_14 = arith.constant dense<0.000000e+00> : vector<1x128xf32>
    %36 = tpu.matmul %34, %35, %cst_14 {dimension_numbers = #tpu.dot_dimension_numbers<[1], [0], [0], [1], [0, 0, 1, 1], [], []>} : vector<1x64xbf16>, vector<64x128xbf16>, vector<1x128xf32> -> vector<1x128xf32>
    %37 = arith.addf %33, %36 : vector<1x128xf32>
    %c0_15 = arith.constant 0 : index
    %c0_16 = arith.constant 0 : index
    %38 = vector.load %arg7[%c0_15, %c0_16] : memref<1x1xf32, #tpu.memory_space<vmem>>, vector<1x1xf32>
    %39 = vector.broadcast %38 : vector<1x1xf32> to vector<1x128xf32>
    %40 = arith.addf %37, %39 : vector<1x128xf32>
    %c0_17 = arith.constant 0 : index
    %c0_18 = arith.constant 0 : index
    %41 = vector.load %arg8[%c0_17, %c0_18] : memref<1x128xf32, #tpu.memory_space<vmem>>, vector<1x128xf32>
    tpu.vector_store %arg8[%c0_17, %c0_18], %40 {strides = array<i32>} : memref<1x128xf32, #tpu.memory_space<vmem>>, vector<1x128xf32>,
    return
  }
  func.func @transform_0(%arg0: i32) -> (i32, i32) {
    %c0_i32 = arith.constant 0 : i32
    %c0_i32_0 = arith.constant 0 : i32
    return %c0_i32, %arg0 : i32, i32
  }
  func.func @transform_1(%arg0: i32) -> (i32, i32) {
    %c0_i32 = arith.constant 0 : i32
    %c0_i32_0 = arith.constant 0 : i32
    %c0_i32_1 = arith.constant 0 : i32
    return %c0_i32, %c0_i32_0 : i32, i32
  }
  func.func @transform_2(%arg0: i32) -> (i32, i32) {
    %c0_i32 = arith.constant 0 : i32
    %c0_i32_0 = arith.constant 0 : i32
    %c0_i32_1 = arith.constant 0 : i32
    return %c0_i32, %c0_i32_0 : i32, i32
  }
  func.func @transform_3(%arg0: i32) -> (i32, i32) {
    %c0_i32 = arith.constant 0 : i32
    %c0_i32_0 = arith.constant 0 : i32
    %c0_i32_1 = arith.constant 0 : i32
    return %c0_i32, %c0_i32_0 : i32, i32
  }
  func.func @transform_4(%arg0: i32) -> (i32, i32) {
    %c0_i32 = arith.constant 0 : i32
    %c0_i32_0 = arith.constant 0 : i32
    %c0_i32_1 = arith.constant 0 : i32
    return %c0_i32, %c0_i32_0 : i32, i32
  }
  func.func @transform_5(%arg0: i32) -> (i32, i32) {
    %c0_i32 = arith.constant 0 : i32
    %c0_i32_0 = arith.constant 0 : i32
    %c0_i32_1 = arith.constant 0 : i32
    return %c0_i32, %c0_i32_0 : i32, i32
  }
  func.func @transform_6(%arg0: i32) -> (i32, i32) {
    %c0_i32 = arith.constant 0 : i32
    %c0_i32_0 = arith.constant 0 : i32
    %c0_i32_1 = arith.constant 0 : i32
    return %c0_i32, %c0_i32_0 : i32, i32
  }
  func.func @transform_7(%arg0: i32) -> (i32, i32) {
    %c0_i32 = arith.constant 0 : i32
    %c0_i32_0 = arith.constant 0 : i32
    return %c0_i32, %arg0 : i32, i32
  }
}

</mosaic_0001>

<llo_original>
// kernel: tpu_custom_call.1
$region0: #{tpu_custom_call.1}
  #allocation0 [shape = 'u32[]', space=smem, size = 0x4, offset = 0x4, fixed_abs, tag = 'smem constant byte address 0x4 - core index']
  #allocation1 [shape = 'u32[144,128]{1,0:T(1,128)}', space=vmem, size = 0x12000, scoped, tag = 'internal scratch']
  #allocation2 [shape = 'f32[1,1]{1,0:T(1,128)S(1)}', space=vmem, size = 0x200, scoped, tag = 'scoped memory for tpu_custom_call.1']
  %s0 = inlined_call_operand.vmem [shape: bf16[128,2], index: 0, kind: input, shape index: {}]
  %s1 = inlined_call_operand.vmem [shape: bf16[208,128], index: 1, kind: input, shape index: {}]
  %s2 = inlined_call_operand.vmem [shape: f32[96,1], index: 2, kind: input, shape index: {}]
  %s3 = inlined_call_operand.vmem [shape: f32[64,1], index: 3, kind: input, shape index: {}]
  %s4 = inlined_call_operand.vmem [shape: bf16[1,96], index: 4, kind: input, shape index: {}]
  %s5 = inlined_call_operand.vmem [shape: bf16[1,64], index: 5, kind: input, shape index: {}]
  %s6 = inlined_call_operand.<no memory space> [shape: f32[1,1], index: 6, kind: input, shape index: {}]
  %s7 = inlined_call_operand.hbm [shape: f32[1,128], index: 7, kind: output, shape index: {}]
  %s8 = sld [smem:[#allocation0]]
  $region38: #{tpu_custom_call.1} parent=0
    _
  %s10 = ssub.s32 1, %s8
  %s11 = scalar_select 0, %s10, %s8
  %v12 = vstv %s6
  %13 = vst [vmem:[#allocation2] sm:$0x1] %v12
  $region1: #{tpu_custom_call.1} parent=0
    #allocation3 [shape = 'u8[512]{0}', space=vmem, size = 0x400, scoped, tag = 'output window, operand 0, single buffered']
    #allocation4 [shape = 's32[1]{0}', space=sflag, size = 0x4, scoped, tag = 'scoped memory for tpu_custom_call.1']
    %14 = vsyncpa [#allocation4], 0
    // Predicated region
    $region2: #{tpu_custom_call.1} parent=1 // pred_check
      _
    $region3: #{tpu_custom_call.1} parent=1 // pred_check_branch
      %16 = sbr.rel (0) target = $region5
    $region4: #{tpu_custom_call.1} parent=1 // pred_region
      _
    $region5: #{tpu_custom_call.1} parent=1 // pred_fallthru
      _
    // Predicated region
    $region6: #{tpu_custom_call.1} parent=1 // pred_check
      _
    $region7: #{tpu_custom_call.1} parent=1 // pred_check_branch
      %18 = sbr.rel (0) target = $region9
    $region8: #{tpu_custom_call.1} parent=1 // pred_region
      _
    $region9: #{tpu_custom_call.1} parent=1 // pred_fallthru
      _
    // Predicated region
    $region10: #{tpu_custom_call.1} parent=1 // pred_check
      _
    $region11: #{tpu_custom_call.1} parent=1 // pred_check_branch
      %20 = sbr.rel (0) target = $region13
    $region12: #{tpu_custom_call.1} parent=1 // pred_region
      _
    $region13: #{tpu_custom_call.1} parent=1 // pred_fallthru
      _
    // Predicated region
    $region14: #{tpu_custom_call.1} parent=1 // pred_check
      _
    $region15: #{tpu_custom_call.1} parent=1 // pred_check_branch
      %22 = sbr.rel (0) target = $region17
    $region16: #{tpu_custom_call.1} parent=1 // pred_region
      _
    $region17: #{tpu_custom_call.1} parent=1 // pred_fallthru
      _
    // Predicated region
    $region18: #{tpu_custom_call.1} parent=1 // pred_check
      _
    $region19: #{tpu_custom_call.1} parent=1 // pred_check_branch
      %24 = sbr.rel (0) target = $region21
    $region20: #{tpu_custom_call.1} parent=1 // pred_region
      _
    $region21: #{tpu_custom_call.1} parent=1 // pred_fallthru
      _
    // Predicated region
    $region22: #{tpu_custom_call.1} parent=1 // pred_check
      _
    $region23: #{tpu_custom_call.1} parent=1 // pred_check_branch
      %26 = sbr.rel (0) target = $region25
    $region24: #{tpu_custom_call.1} parent=1 // pred_region
      _
    $region25: #{tpu_custom_call.1} parent=1 // pred_fallthru
      _
    // Predicated region
    $region26: #{tpu_custom_call.1} parent=1 // pred_check
      _
    $region27: #{tpu_custom_call.1} parent=1 // pred_check_branch
      %28 = sbr.rel (0) target = $region29
    $region28: #{tpu_custom_call.1} parent=1 // pred_region
      _
    $region29: #{tpu_custom_call.1} parent=1 // pred_fallthru
      _
    %v30 = vld [vmem:[%s0] sm:$0xf]
    %v31 = vld [vmem:[%s0 + $0x4] sm:$0xf]
    %v32 = vld [vmem:[%s0 + $0x8] sm:$0xf]
    %v33 = vld [vmem:[%s0 + $0xc] sm:$0xf]
    %v34 = vld [vmem:[%s0 + $0x10] sm:$0xf]
    %v35 = vld [vmem:[%s0 + $0x14] sm:$0xf]
    %v36 = vld [vmem:[%s0 + $0x18] sm:$0xf]
    %v37 = vld [vmem:[%s0 + $0x1c] sm:$0xf]
    %v38 = vld [vmem:[%s0 + $0x20] sm:$0xf]
    %v39 = vld [vmem:[%s0 + $0x24] sm:$0xf]
    %v40 = vld [vmem:[%s0 + $0x28] sm:$0xf]
    %v41 = vld [vmem:[%s0 + $0x2c] sm:$0xf]
    %v42 = vld [vmem:[%s0 + $0x30] sm:$0xf]
    %v43 = vld [vmem:[%s0 + $0x34] sm:$0xf]
    %v44 = vld [vmem:[%s0 + $0x38] sm:$0xf]
    %v45 = vld [vmem:[%s0 + $0x3c] sm:$0xf]
    %v46 = vld [vmem:[%s1] sm:$0xf]
    %v47 = vld [vmem:[%s1 + $0x4] sm:$0xf]
    %v48 = vld [vmem:[%s1 + $0x8] sm:$0xf]
    %v49 = vld [vmem:[%s1 + $0xc] sm:$0xf]
    %v50 = vld [vmem:[%s1 + $0x10] sm:$0xf]
    %v51 = vld [vmem:[%s1 + $0x14] sm:$0xf]
    %v52 = vld [vmem:[%s1 + $0x18] sm:$0xf]
    %v53 = vld [vmem:[%s1 + $0x1c] sm:$0xf]
    %v54 = vld [vmem:[%s1 + $0x20] sm:$0xf]
    %v55 = vld [vmem:[%s1 + $0x24] sm:$0xf]
    %v56 = vld [vmem:[%s1 + $0x28] sm:$0xf]
    %v57 = vld [vmem:[%s1 + $0x2c] sm:$0xf]
    %v58 = vld [vmem:[%s1 + $0x30] sm:$0xf]
    %v59 = vld [vmem:[%s1 + $0x34] sm:$0xf]
    %v60 = vld [vmem:[%s1 + $0x38] sm:$0xf]
    %v61 = vld [vmem:[%s1 + $0x3c] sm:$0xf]
    %v62 = vld [vmem:[%s1 + $0x40] sm:$0xf]
    %v63 = vld [vmem:[%s1 + $0x44] sm:$0xf]
    %v64 = vld [vmem:[%s1 + $0x48] sm:$0xf]
    %v65 = vld [vmem:[%s1 + $0x4c] sm:$0xf]
    %v66 = vld [vmem:[%s1 + $0x50] sm:$0xf]
    %v67 = vld [vmem:[%s1 + $0x54] sm:$0xf]
    %v68 = vld [vmem:[%s1 + $0x58] sm:$0xf]
    %v69 = vld [vmem:[%s1 + $0x5c] sm:$0xf]
    %v70 = vld [vmem:[%s1 + $0x60] sm:$0xf]
    %v71 = vld [vmem:[%s1 + $0x64] sm:$0xf]
    %v98 = vunpack.c.l.b16 %v46
    %v99 = vunpack.c.l.b16 %v47
    %v100 = vunpack.c.l.b16 %v48
    %v101 = vunpack.c.l.b16 %v49
    %v102 = vunpack.c.l.b16 %v50
    %v103 = vunpack.c.l.b16 %v51
    %v104 = vunpack.c.l.b16 %v52
    %v105 = vunpack.c.l.b16 %v53
    %v106 = vunpack.c.l.b16 %v54
    %v107 = vunpack.c.l.b16 %v55
    %v108 = vunpack.c.l.b16 %v56
    %v109 = vunpack.c.l.b16 %v57
    %v110 = vunpack.c.l.b16 %v58
    %v111 = vunpack.c.l.b16 %v59
    %v112 = vunpack.c.l.b16 %v60
    %v113 = vunpack.c.l.b16 %v61
    %v114 = vunpack.c.l.b16 %v62
    %v115 = vunpack.c.l.b16 %v63
    %v116 = vunpack.c.l.b16 %v64
    %v117 = vunpack.c.l.b16 %v65
    %v118 = vunpack.c.l.b16 %v66
    %v119 = vunpack.c.l.b16 %v67
    %v120 = vunpack.c.l.b16 %v68
    %v121 = vunpack.c.l.b16 %v69
    %v122 = vunpack.c.l.b16 %v70
    %v123 = vunpack.c.l.b16 %v71
    %v124 = vpack.c.b16 %v99, %v98
    %v125 = vpack.c.b16 %v101, %v100
    %v126 = vpack.c.b16 %v103, %v102
    %v127 = vpack.c.b16 %v105, %v104
    %v128 = vpack.c.b16 %v107, %v106
    %v129 = vpack.c.b16 %v109, %v108
    %v130 = vpack.c.b16 %v111, %v110
    %v131 = vpack.c.b16 %v113, %v112
    %v132 = vpack.c.b16 %v115, %v114
    %v133 = vpack.c.b16 %v117, %v116
    %v134 = vpack.c.b16 %v119, %v118
    %v135 = vpack.c.b16 %v121, %v120
    %v136 = vpack.c.b16 %v123, %v122
    %v166 = vunpack.c.l.b16 %v30
    %v167 = vunpack.c.l.b16 %v31
    %v168 = vunpack.c.l.b16 %v32
    %v169 = vunpack.c.l.b16 %v33
    %v170 = vunpack.c.l.b16 %v34
    %v171 = vunpack.c.l.b16 %v35
    %v172 = vunpack.c.l.b16 %v36
    %v173 = vunpack.c.l.b16 %v37
    %v174 = vunpack.c.l.b16 %v38
    %v175 = vunpack.c.l.b16 %v39
    %v176 = vunpack.c.l.b16 %v40
    %v177 = vunpack.c.l.b16 %v41
    %v178 = vunpack.c.l.b16 %v42
    %v179 = vunpack.c.l.b16 %v43
    %v180 = vunpack.c.l.b16 %v44
    %v181 = vunpack.c.l.b16 %v45
    %v182 = vpack.c.b16 %v167, %v166
    %v183 = vpack.c.b16 %v169, %v168
    %v184 = vpack.c.b16 %v171, %v170
    %v185 = vpack.c.b16 %v173, %v172
    %v186 = vpack.c.b16 %v175, %v174
    %v187 = vpack.c.b16 %v177, %v176
    %v188 = vpack.c.b16 %v179, %v178
    %v189 = vpack.c.b16 %v181, %v180
    %198 = vmatprep.subr.bf16.mxu0 0
    %199 = vmatpush1.bf16.msra.mxu0 %v182
    %200 = vmatprep.subr.bf16.mxu0 0
    %201 = vmatpush1.bf16.msra.mxu0 %v183
    %202 = vmatprep.subr.bf16.mxu0 0
    %203 = vmatpush1.bf16.msra.mxu0 %v184
    %204 = vmatprep.subr.bf16.mxu0 0
    %205 = vmatpush1.bf16.msra.mxu0 %v185
    %206 = vmatprep.subr.bf16.mxu0 0
    %207 = vmatpush1.bf16.msra.mxu0 %v186
    %208 = vmatprep.subr.bf16.mxu0 0
    %209 = vmatpush1.bf16.msra.mxu0 %v187
    %210 = vmatprep.subr.bf16.mxu0 0
    %211 = vmatpush1.bf16.msra.mxu0 %v188
    %212 = vmatprep.subr.bf16.mxu0 0
    %213 = vmatpush1.bf16.msra.mxu0 %v189
    %214 = vmatprep.subr.bf16.mxu0 0
    %215 = vmatpush1.bf16.msra.mxu0 0
    %216 = vmatprep.subr.bf16.mxu0 0
    %217 = vmatpush1.bf16.msra.mxu0 0
    %218 = vmatprep.subr.bf16.mxu0 0
    %219 = vmatpush1.bf16.msra.mxu0 0
    %220 = vmatprep.subr.bf16.mxu0 0
    %221 = vmatpush1.bf16.msra.mxu0 0
    %222 = vmatprep.subr.bf16.mxu0 0
    %223 = vmatpush1.bf16.msra.mxu0 0
    %224 = vmatprep.subr.bf16.mxu0 0
    %225 = vmatpush1.bf16.msra.mxu0 0
    %226 = vmatprep.subr.bf16.mxu0 0
    %227 = vmatpush1.bf16.msra.mxu0 0
    %228 = vmatprep.subr.bf16.mxu0 0
    %229 = vmatpush1.bf16.msra.mxu0 0
    %230 = vmatprep.mubr.bf16.mxu0 0
    %231 = vmatmul.mubr.bf16.gmra.mrb[0].mxu0 %v124
    %v232 = vpop.f32.mrb[0].mxu0
    %v233 = vadd.f32 0.0, %v232
    %v234 = vpop.f32.mrb[0].mxu0
    %v235 = vpop.f32.mrb[0].mxu0
    %v236 = vadd.f32 0.0, %v235
    %v237 = vpop.f32.mrb[0].mxu0
    %238 = vmatprep.mubr.bf16.mxu0 0
    %239 = vmatmul.mubr.bf16.gmra.mrb[0].mxu0 %v125
    %v240 = vpop.f32.mrb[0].mxu0
    %v241 = vadd.f32 0.0, %v240
    %v242 = vpop.f32.mrb[0].mxu0
    %v243 = vpop.f32.mrb[0].mxu0
    %v244 = vadd.f32 0.0, %v243
    %v245 = vpop.f32.mrb[0].mxu0
    %246 = vmatprep.mubr.bf16.mxu0 0
    %247 = vmatmul.mubr.bf16.gmra.mrb[0].mxu0 %v126
    %v248 = vpop.f32.mrb[0].mxu0
    %v249 = vadd.f32 0.0, %v248
    %v250 = vpop.f32.mrb[0].mxu0
    %v251 = vpop.f32.mrb[0].mxu0
    %v252 = vadd.f32 0.0, %v251
    %v253 = vpop.f32.mrb[0].mxu0
    %254 = vmatprep.mubr.bf16.mxu0 0
    %255 = vmatmul.mubr.bf16.gmra.mrb[0].mxu0 %v127
    %v256 = vpop.f32.mrb[0].mxu0
    %v257 = vadd.f32 0.0, %v256
    %v258 = vpop.f32.mrb[0].mxu0
    %v259 = vpop.f32.mrb[0].mxu0
    %v260 = vadd.f32 0.0, %v259
    %v261 = vpop.f32.mrb[0].mxu0
    %262 = vmatprep.mubr.bf16.mxu0 0
    %263 = vmatmul.mubr.bf16.gmra.mrb[0].mxu0 %v128
    %v264 = vpop.f32.mrb[0].mxu0
    %v265 = vadd.f32 0.0, %v264
    %v266 = vpop.f32.mrb[0].mxu0
    %v267 = vpop.f32.mrb[0].mxu0
    %v268 = vadd.f32 0.0, %v267
    %v269 = vpop.f32.mrb[0].mxu0
    %270 = vmatprep.mubr.bf16.mxu0 0
    %271 = vmatmul.mubr.bf16.gmra.mrb[0].mxu0 %v129
    %v272 = vpop.f32.mrb[0].mxu0
    %v273 = vadd.f32 0.0, %v272
    %v274 = vpop.f32.mrb[0].mxu0
    %v275 = vpop.f32.mrb[0].mxu0
    %v276 = vadd.f32 0.0, %v275
    %v277 = vpop.f32.mrb[0].mxu0
    %278 = vmatprep.mubr.bf16.mxu0 0
    %279 = vmatmul.mubr.bf16.gmra.mrb[0].mxu0 %v130
    %v280 = vpop.f32.mrb[0].mxu0
    %v281 = vadd.f32 0.0, %v280
    %v282 = vpop.f32.mrb[0].mxu0
    %v283 = vpop.f32.mrb[0].mxu0
    %v284 = vadd.f32 0.0, %v283
    %v285 = vpop.f32.mrb[0].mxu0
    %286 = vmatprep.mubr.bf16.mxu0 0
    %287 = vmatmul.mubr.bf16.gmra.mrb[0].mxu0 %v131
    %v288 = vpop.f32.mrb[0].mxu0
    %v289 = vadd.f32 0.0, %v288
    %v290 = vpop.f32.mrb[0].mxu0
    %v291 = vpop.f32.mrb[0].mxu0
    %v292 = vadd.f32 0.0, %v291
    %v293 = vpop.f32.mrb[0].mxu0
    %294 = vmatprep.mubr.bf16.mxu0 0
    %295 = vmatmul.mubr.bf16.gmra.mrb[0].mxu0 %v132
    %v296 = vpop.f32.mrb[0].mxu0
    %v297 = vadd.f32 0.0, %v296
    %v298 = vpop.f32.mrb[0].mxu0
    %v299 = vpop.f32.mrb[0].mxu0
    %v300 = vadd.f32 0.0, %v299
    %v301 = vpop.f32.mrb[0].mxu0
    %302 = vmatprep.mubr.bf16.mxu0 0
    %303 = vmatmul.mubr.bf16.gmra.mrb[0].mxu0 %v133
    %v304 = vpop.f32.mrb[0].mxu0
    %v305 = vadd.f32 0.0, %v304
    %v306 = vpop.f32.mrb[0].mxu0
    %v307 = vpop.f32.mrb[0].mxu0
    %v308 = vadd.f32 0.0, %v307
    %v309 = vpop.f32.mrb[0].mxu0
    %310 = vmatprep.mubr.bf16.mxu0 0
    %311 = vmatmul.mubr.bf16.gmra.mrb[0].mxu0 %v134
    %v312 = vpop.f32.mrb[0].mxu0
    %v313 = vadd.f32 0.0, %v312
    %v314 = vpop.f32.mrb[0].mxu0
    %v315 = vpop.f32.mrb[0].mxu0
    %v316 = vadd.f32 0.0, %v315
    %v317 = vpop.f32.mrb[0].mxu0
    %318 = vmatprep.mubr.bf16.mxu0 0
    %319 = vmatmul.mubr.bf16.gmra.mrb[0].mxu0 %v135
    %v320 = vpop.f32.mrb[0].mxu0
    %v321 = vadd.f32 0.0, %v320
    %v322 = vpop.f32.mrb[0].mxu0
    %v323 = vpop.f32.mrb[0].mxu0
    %v324 = vadd.f32 0.0, %v323
    %v325 = vpop.f32.mrb[0].mxu0
    %326 = vmatprep.mubr.bf16.mxu0 0
    %327 = vmatmul.mubr.bf16.gmra.mrb[0].mxu0 %v136
    %v328 = vpop.f32.mrb[0].mxu0
    %v329 = vadd.f32 0.0, %v328
    %v330 = vpop.f32.mrb[0].mxu0
    %v331 = vpop.f32.mrb[0].mxu0
    %v332 = vadd.f32 0.0, %v331
    %v333 = vpop.f32.mrb[0].mxu0
    %334 = vdwg.mxu0
    %v335 = vmax.f32 %v233, %v236
    %v336 = vmax.f32 %v236, %v241
    %v337 = vmax.f32 %v241, %v244
    %v338 = vmax.f32 %v244, %v249
    %v339 = vmax.f32 %v249, %v252
    %v340 = vmax.f32 %v252, %v257
    %v341 = vmax.f32 %v257, %v260
    %v342 = vmax.f32 %v260, %v265
    %v343 = vmax.f32 %v265, %v268
    %v344 = vmax.f32 %v268, %v273
    %v345 = vmax.f32 %v273, %v276
    %v346 = vmax.f32 %v276, %v281
    %v347 = vmax.f32 %v335, %v241
    %v348 = vmax.f32 %v336, %v244
    %v349 = vmax.f32 %v337, %v249
    %v350 = vmax.f32 %v338, %v252
    %v351 = vmax.f32 %v339, %v257
    %v352 = vmax.f32 %v340, %v260
    %v353 = vmax.f32 %v341, %v265
    %v354 = vmax.f32 %v342, %v268
    %v355 = vmax.f32 %v343, %v273
    %v356 = vmax.f32 %v344, %v276
    %v357 = vmax.f32 %v345, %v281
    %v358 = vmax.f32 %v346, %v284
    %v359 = vmax.f32 %v289, %v292
    %v360 = vmax.f32 %v292, %v297
    %v361 = vmax.f32 %v297, %v300
    %v362 = vmax.f32 %v300, %v305
    %v363 = vmax.f32 %v305, %v308
    %v364 = vmax.f32 %v308, %v313
    %v365 = vmax.f32 %v313, %v316
    %v366 = vmax.f32 %v316, %v321
    %v367 = vmax.f32 %v359, %v297
    %v368 = vmax.f32 %v360, %v300
    %v369 = vmax.f32 %v361, %v305
    %v370 = vmax.f32 %v362, %v308
    %v371 = vmax.f32 %v363, %v313
    %v372 = vmax.f32 %v364, %v316
    %v373 = vmax.f32 %v365, %v321
    %v374 = vmax.f32 %v366, %v324
    %v375 = vmax.f32 %v367, %v300
    %v376 = vmax.f32 %v368, %v305
    %v377 = vmax.f32 %v369, %v308
    %v378 = vmax.f32 %v370, %v313
    %v379 = vmax.f32 %v371, %v316
    %v380 = vmax.f32 %v372, %v321
    %v381 = vmax.f32 %v373, %v324
    %v382 = vmax.f32 %v374, %v329
    %v383 = vmax.f32 %v375, %v305
    %v384 = vmax.f32 %v376, %v308
    %v385 = vmax.f32 %v377, %v313
    %v386 = vmax.f32 %v378, %v316
    %v387 = vmax.f32 %v379, %v321
    %v388 = vmax.f32 %v380, %v324
    %v389 = vmax.f32 %v381, %v329
    %v390 = vmax.f32 %v382, %v332
    %v391 = vld [vmem:[%s2] sm:$0xff]
    %v392 = vld [vmem:[%s2 + $0x8] sm:$0xff]
    %v393 = vld [vmem:[%s2 + $0x10] sm:$0xff]
    %v394 = vld [vmem:[%s2 + $0x18] sm:$0xff]
    %v395 = vld [vmem:[%s2 + $0x20] sm:$0xff]
    %v396 = vld [vmem:[%s2 + $0x28] sm:$0xff]
    %v397 = vld [vmem:[%s2 + $0x30] sm:$0xff]
    %v398 = vld [vmem:[%s2 + $0x38] sm:$0xff]
    %v399 = vld [vmem:[%s2 + $0x40] sm:$0xff]
    %v400 = vld [vmem:[%s2 + $0x48] sm:$0xff]
    %v401 = vld [vmem:[%s2 + $0x50] sm:$0xff]
    %v402 = vld [vmem:[%s2 + $0x58] sm:$0xff]
    %404 = vset.pattern.permute.xlu0 0
    %405 = vperm.xlu0 %404, %v391
    %v406 = vpop.permute.xlu0 %405
    %409 = vset.pattern.permute.xlu0 0
    %410 = vperm.xlu0 %409, %v392
    %v411 = vpop.permute.xlu0 %410
    %414 = vset.pattern.permute.xlu0 0
    %415 = vperm.xlu0 %414, %v393
    %v416 = vpop.permute.xlu0 %415
    %419 = vset.pattern.permute.xlu0 0
    %420 = vperm.xlu0 %419, %v394
    %v421 = vpop.permute.xlu0 %420
    %424 = vset.pattern.permute.xlu0 0
    %425 = vperm.xlu0 %424, %v395
    %v426 = vpop.permute.xlu0 %425
    %429 = vset.pattern.permute.xlu0 0
    %430 = vperm.xlu0 %429, %v396
    %v431 = vpop.permute.xlu0 %430
    %434 = vset.pattern.permute.xlu0 0
    %435 = vperm.xlu0 %434, %v397
    %v436 = vpop.permute.xlu0 %435
    %439 = vset.pattern.permute.xlu0 0
    %440 = vperm.xlu0 %439, %v398
    %v441 = vpop.permute.xlu0 %440
    %444 = vset.pattern.permute.xlu0 0
    %445 = vperm.xlu0 %444, %v399
    %v446 = vpop.permute.xlu0 %445
    %449 = vset.pattern.permute.xlu0 0
    %450 = vperm.xlu0 %449, %v400
    %v451 = vpop.permute.xlu0 %450
    %454 = vset.pattern.permute.xlu0 0
    %455 = vperm.xlu0 %454, %v401
    %v456 = vpop.permute.xlu0 %455
    %459 = vset.pattern.permute.xlu0 0
    %460 = vperm.xlu0 %459, %v402
    %v461 = vpop.permute.xlu0 %460
    %v463 = vadd.f32 %v347, %v406
    %v464 = vadd.f32 %v348, %v411
    %v465 = vadd.f32 %v349, %v416
    %v466 = vadd.f32 %v350, %v421
    %v467 = vadd.f32 %v351, %v426
    %v468 = vadd.f32 %v352, %v431
    %v469 = vadd.f32 %v353, %v436
    %v470 = vadd.f32 %v354, %v441
    %v471 = vadd.f32 %v355, %v446
    %v472 = vadd.f32 %v356, %v451
    %v473 = vadd.f32 %v357, %v456
    %v474 = vadd.f32 %v358, %v461
    %v475 = vld [vmem:[%s3] sm:$0xff]
    %v476 = vld [vmem:[%s3 + $0x8] sm:$0xff]
    %v477 = vld [vmem:[%s3 + $0x10] sm:$0xff]
    %v478 = vld [vmem:[%s3 + $0x18] sm:$0xff]
    %v479 = vld [vmem:[%s3 + $0x20] sm:$0xff]
    %v480 = vld [vmem:[%s3 + $0x28] sm:$0xff]
    %v481 = vld [vmem:[%s3 + $0x30] sm:$0xff]
    %v482 = vld [vmem:[%s3 + $0x38] sm:$0xff]
    %484 = vset.pattern.permute.xlu0 0
    %485 = vperm.xlu0 %484, %v475
    %v486 = vpop.permute.xlu0 %485
    %489 = vset.pattern.permute.xlu0 0
    %490 = vperm.xlu0 %489, %v476
    %v491 = vpop.permute.xlu0 %490
    %494 = vset.pattern.permute.xlu0 0
    %495 = vperm.xlu0 %494, %v477
    %v496 = vpop.permute.xlu0 %495
    %499 = vset.pattern.permute.xlu0 0
    %500 = vperm.xlu0 %499, %v478
    %v501 = vpop.permute.xlu0 %500
    %504 = vset.pattern.permute.xlu0 0
    %505 = vperm.xlu0 %504, %v479
    %v506 = vpop.permute.xlu0 %505
    %509 = vset.pattern.permute.xlu0 0
    %510 = vperm.xlu0 %509, %v480
    %v511 = vpop.permute.xlu0 %510
    %514 = vset.pattern.permute.xlu0 0
    %515 = vperm.xlu0 %514, %v481
    %v516 = vpop.permute.xlu0 %515
    %519 = vset.pattern.permute.xlu0 0
    %520 = vperm.xlu0 %519, %v482
    %v521 = vpop.permute.xlu0 %520
    %v523 = vadd.f32 %v383, %v486
    %v524 = vadd.f32 %v384, %v491
    %v525 = vadd.f32 %v385, %v496
    %v526 = vadd.f32 %v386, %v501
    %v527 = vadd.f32 %v387, %v506
    %v528 = vadd.f32 %v388, %v511
    %v529 = vadd.f32 %v389, %v516
    %v530 = vadd.f32 %v390, %v521
    %v531 = vmul.f32 %v463, 0.01
    %v532 = vmul.f32 %v464, 0.01
    %v533 = vmul.f32 %v465, 0.01
    %v534 = vmul.f32 %v466, 0.01
    %v535 = vmul.f32 %v467, 0.01
    %v536 = vmul.f32 %v468, 0.01
    %v537 = vmul.f32 %v469, 0.01
    %v538 = vmul.f32 %v470, 0.01
    %v539 = vmul.f32 %v471, 0.01
    %v540 = vmul.f32 %v472, 0.01
    %v541 = vmul.f32 %v473, 0.01
    %v542 = vmul.f32 %v474, 0.01
    %v543 = vmax.f32 %v463, %v531
    %v544 = vmax.f32 %v464, %v532
    %v545 = vmax.f32 %v465, %v533
    %v546 = vmax.f32 %v466, %v534
    %v547 = vmax.f32 %v467, %v535
    %v548 = vmax.f32 %v468, %v536
    %v549 = vmax.f32 %v469, %v537
    %v550 = vmax.f32 %v470, %v538
    %v551 = vmax.f32 %v471, %v539
    %v552 = vmax.f32 %v472, %v540
    %v553 = vmax.f32 %v473, %v541
    %v554 = vmax.f32 %v474, %v542
    %v555 = vmul.f32 %v523, 0.01
    %v556 = vmul.f32 %v524, 0.01
    %v557 = vmul.f32 %v525, 0.01
    %v558 = vmul.f32 %v526, 0.01
    %v559 = vmul.f32 %v527, 0.01
    %v560 = vmul.f32 %v528, 0.01
    %v561 = vmul.f32 %v529, 0.01
    %v562 = vmul.f32 %v530, 0.01
    %v563 = vmax.f32 %v523, %v555
    %v564 = vmax.f32 %v524, %v556
    %v565 = vmax.f32 %v525, %v557
    %v566 = vmax.f32 %v526, %v558
    %v567 = vmax.f32 %v527, %v559
    %v568 = vmax.f32 %v528, %v560
    %v569 = vmax.f32 %v529, %v561
    %v570 = vmax.f32 %v530, %v562
    %v571 = vld [vmem:[%s4] sm:$0x1]
    %v572 = vpack.c.bf16 %v544, %v543
    %v573 = vpack.c.bf16 %v546, %v545
    %v574 = vpack.c.bf16 %v548, %v547
    %v575 = vpack.c.bf16 %v550, %v549
    %v576 = vpack.c.bf16 %v552, %v551
    %v577 = vpack.c.bf16 %v554, %v553
    %v578 = vld [vmem:[%s5] sm:$0x1]
    %v579 = vpack.c.bf16 %v564, %v563
    %v580 = vpack.c.bf16 %v566, %v565
    %v581 = vpack.c.bf16 %v568, %v567
    %v582 = vpack.c.bf16 %v570, %v569
    %vm583 = vcmask 523264
    %v585 = vsel %vm583, %v578, 0
    %587 = vmatprep.subr.bf16.mxu0 0
    %588 = vmatpush1.bf16.msra.mxu0 %v579
    %589 = vmatprep.subr.bf16.mxu0 0
    %590 = vmatpush1.bf16.msra.mxu0 %v580
    %591 = vmatprep.subr.bf16.mxu0 0
    %592 = vmatpush1.bf16.msra.mxu0 %v581
    %593 = vmatprep.subr.bf16.mxu0 0
    %594 = vmatpush1.bf16.msra.mxu0 %v582
    %595 = vmatprep.subr.bf16.mxu0 0
    %596 = vmatpush1.bf16.msra.mxu0 0
    %597 = vmatprep.subr.bf16.mxu0 0
    %598 = vmatpush1.bf16.msra.mxu0 0
    %599 = vmatprep.subr.bf16.mxu0 0
    %600 = vmatpush1.bf16.msra.mxu0 0
    %601 = vmatprep.subr.bf16.mxu0 0
    %602 = vmatpush1.bf16.msra.mxu0 0
    %603 = vmatprep.subr.bf16.mxu0 0
    %604 = vmatpush1.bf16.msra.mxu0 0
    %605 = vmatprep.subr.bf16.mxu0 0
    %606 = vmatpush1.bf16.msra.mxu0 0
    %607 = vmatprep.subr.bf16.mxu0 0
    %608 = vmatpush1.bf16.msra.mxu0 0
    %609 = vmatprep.subr.bf16.mxu0 0
    %610 = vmatpush1.bf16.msra.mxu0 0
    %611 = vmatprep.subr.bf16.mxu0 0
    %612 = vmatpush1.bf16.msra.mxu0 0
    %613 = vmatprep.subr.bf16.mxu0 0
    %614 = vmatpush1.bf16.msra.mxu0 0
    %615 = vmatprep.subr.bf16.mxu0 0
    %616 = vmatpush1.bf16.msra.mxu0 0
    %617 = vmatprep.subr.bf16.mxu0 0
    %618 = vmatpush1.bf16.msra.mxu0 0
    %619 = vmatprep.mubr.bf16.mxu0 0
    %620 = vmatmul.mubr.bf16.gmra.mrb[0].mxu0 %v585
    %v621 = vpop.f32.mrb[0].mxu0
    %v622 = vadd.f32 0.0, %v621
    %v623 = vpop.f32.mrb[0].mxu0
    %v624 = vpop.f32.mrb[0].mxu0
    %v625 = vpop.f32.mrb[0].mxu0
    %626 = vdwg.mxu0
    %vm627 = vcmask 785408
    %v629 = vsel %vm627, %v571, 0
    %631 = vmatprep.subr.bf16.mxu0 0
    %632 = vmatpush1.bf16.msra.mxu0 %v572
    %633 = vmatprep.subr.bf16.mxu0 0
    %634 = vmatpush1.bf16.msra.mxu0 %v573
    %635 = vmatprep.subr.bf16.mxu0 0
    %636 = vmatpush1.bf16.msra.mxu0 %v574
    %637 = vmatprep.subr.bf16.mxu0 0
    %638 = vmatpush1.bf16.msra.mxu0 %v575
    %639 = vmatprep.subr.bf16.mxu0 0
    %640 = vmatpush1.bf16.msra.mxu0 %v576
    %641 = vmatprep.subr.bf16.mxu0 0
    %642 = vmatpush1.bf16.msra.mxu0 %v577
    %643 = vmatprep.subr.bf16.mxu0 0
    %644 = vmatpush1.bf16.msra.mxu0 0
    %645 = vmatprep.subr.bf16.mxu0 0
    %646 = vmatpush1.bf16.msra.mxu0 0
    %647 = vmatprep.subr.bf16.mxu0 0
    %648 = vmatpush1.bf16.msra.mxu0 0
    %649 = vmatprep.subr.bf16.mxu0 0
    %650 = vmatpush1.bf16.msra.mxu0 0
    %651 = vmatprep.subr.bf16.mxu0 0
    %652 = vmatpush1.bf16.msra.mxu0 0
    %653 = vmatprep.subr.bf16.mxu0 0
    %654 = vmatpush1.bf16.msra.mxu0 0
    %655 = vmatprep.subr.bf16.mxu0 0
    %656 = vmatpush1.bf16.msra.mxu0 0
    %657 = vmatprep.subr.bf16.mxu0 0
    %658 = vmatpush1.bf16.msra.mxu0 0
    %659 = vmatprep.subr.bf16.mxu0 0
    %660 = vmatpush1.bf16.msra.mxu0 0
    %661 = vmatprep.subr.bf16.mxu0 0
    %662 = vmatpush1.bf16.msra.mxu0 0
    %663 = vmatprep.mubr.bf16.mxu0 0
    %664 = vmatmul.mubr.bf16.gmra.mrb[0].mxu0 %v629
    %v665 = vpop.f32.mrb[0].mxu0
    %v666 = vadd.f32 %v622, %v665
    %v667 = vpop.f32.mrb[0].mxu0
    %v668 = vpop.f32.mrb[0].mxu0
    %v669 = vpop.f32.mrb[0].mxu0
    %670 = vdwg.mxu0
    %v671 = vld [vmem:[#allocation2] sm:$0x1]
    %673 = vset.pattern.permute.xlu0 0
    %674 = vperm.xlu0 %673, %v671
    %v675 = vpop.permute.xlu0 %674
    %v677 = vlaneseq
    %v678 = vshrl.u32 %v677, 7
    %v679 = vsub.s32 0, %v678
    %v680 = vrot.slane %v675, %v679
    %v681 = vadd.f32 %v666, %v680
    %682 = vst [vmem:[#allocation3] sm:$0x1] %v681
    // Predicated region
    $region30: #{tpu_custom_call.1} parent=1 // pred_check
      _
    $region31: #{tpu_custom_call.1} parent=1 // pred_check_branch
      %684 = sbr.rel (0) target = $region33
    $region32: #{tpu_custom_call.1} parent=1 // pred_region
      %s686 = ssub.s32 16, 16
      %687 = vsyncadd [#allocation4], %s686
      %s689 = sshll.u32 [#allocation3], 4
      %s690 = int_to_ptr.vmem [resolvable:$true] %s689
      %692 = dma.vmem_to_hbm [thread:$0]  %s690, 16, %s7, [#allocation4]
    $region33: #{tpu_custom_call.1} parent=1 // pred_fallthru
      _
    // Predicated region
    $region34: #{tpu_custom_call.1} parent=1 // pred_check
      _
    $region35: #{tpu_custom_call.1} parent=1 // pred_check_branch
      %694 = sbr.rel (0) target = $region37
    $region36: #{tpu_custom_call.1} parent=1 // pred_region
      %695 = dma.done [#allocation4], 16
    $region37: #{tpu_custom_call.1} parent=1 // pred_fallthru
      _
    %696 = vsyncpa [#allocation4], 1

</llo_original>
